<compile_context>
chip_gen: v7x
topology: tpu7x:2x2x1
jax: 0.10.0
libtpu: 0.0.40
codegen_flags: <defaults>
</compile_context>

<pallas_src>
import functools

import jax
import jax.numpy as jnp
from jax import lax
from jax.experimental import pallas as pl
from jax.experimental.pallas import tpu as pltpu


# Conservative double-buffered working-set budget (bytes): leaves headroom on
# v7x's 64 MiB physical VMEM and is far below v5e/v6e's 128 MiB.
_VMEM_BUDGET = 44 * (1 << 20)


def _linear_kernel_fullk(x_ref, w_ref, b_ref, o_ref):
    """n_k == 1 variant: one dot over the full K, bias fused, no scratch."""
    acc = lax.dot_general(
        x_ref[...], w_ref[...],
        dimension_numbers=(((1,), (1,)), ((), ())),   # x[TM,K] . W[TN,K]^T
        preferred_element_type=jnp.float32,
    )
    o_ref[...] = (acc + b_ref[...].astype(jnp.float32)).astype(o_ref.dtype)


def _linear_kernel_multik(x_ref, w_ref, b_ref, o_ref, acc_ref, *, n_k, tile_k, k_tail):
    """K-split variant: resident f32 accumulator, K innermost on the grid.

    # TODO(synk): on v7x an in-kernel K loop could accumulate in the MRB and
    # skip the VMEM accumulator RMW entirely; kept grid-axis form for v5e/v6e.
    """
    k = pl.program_id(2)

    def accumulate(x, w):
        part = lax.dot_general(
            x, w,
            dimension_numbers=(((1,), (1,)), ((), ())),
            preferred_element_type=jnp.float32,
        )

        @pl.when(k == 0)
        def _():
            # '=' on the first step, fused with the bias add: no separate
            # zero-init pass and no epilogue bias-add pass.
            acc_ref[...] = part + b_ref[...].astype(jnp.float32)

        @pl.when(k > 0)
        def _():
            acc_ref[...] += part

    if k_tail:
        # Ragged contraction dim: masking runs ONLY on the final K step; all
        # other steps are unmasked MXU + accumulate.
        @pl.when(k < n_k - 1)
        def _():
            accumulate(x_ref[...], w_ref[...])

        @pl.when(k == n_k - 1)
        def _():
            col = lax.broadcasted_iota(jnp.int32, (1, tile_k), 1)
            keep = col < k_tail
            x = x_ref[...]
            w = w_ref[...]
            # Mask BOTH operands so OOB garbage (possibly NaN/Inf) can never
            # reach valid accumulator entries.
            accumulate(jnp.where(keep, x, jnp.zeros_like(x)),
                       jnp.where(keep, w, jnp.zeros_like(w)))
    else:
        accumulate(x_ref[...], w_ref[...])

    @pl.when(k == n_k - 1)
    def _():
        o_ref[...] = acc_ref[...].astype(o_ref.dtype)


def _pick_tile(dim, preferred, align):
    """Use the full extent if it fits, else the largest aligned tile <= preferred."""
    if dim <= preferred:
        return dim
    return max(align, (preferred // align) * align)


def _vmem_estimate(tm, tn, tk, n_k, x_bytes, w_bytes, o_bytes):
    est = 2 * tm * tk * x_bytes        # x tile, double-buffered
    est += 2 * tn * tk * w_bytes       # W tile, double-buffered
    est += 2 * tn * w_bytes            # bias tile (tiny)
    est += 2 * tm * tn * o_bytes       # output tile, double-buffered
    if n_k > 1:
        est += tm * tn * 4             # resident f32 accumulator scratch
    return est


def linear_pallas(x, w, b, *, tile_m=None, tile_n=None, tile_k=None,
                  compute_in_bf16=False):
    """y = x @ w.T + b  (torch.nn.Linear semantics).

    x: [..., in_feat], w: [out_feat, in_feat], b: [out_feat]
    returns: [..., out_feat]
    """
    in_feat = x.shape[-1]
    out_feat = w.shape[0]
    lead = x.shape[:-1]
    out_dtype = x.dtype

    x2d = x.reshape(-1, in_feat)
    if compute_in_bf16 and x2d.dtype == jnp.float32:
        # All generations' MXUs are bf16-native; accumulation stays f32 and the
        # output keeps the original dtype.
        x2d = x2d.astype(jnp.bfloat16)
        w = w.astype(jnp.bfloat16)

    M, K, N = x2d.shape[0], in_feat, out_feat
    x_bytes = jnp.dtype(x2d.dtype).itemsize
    w_bytes = jnp.dtype(w.dtype).itemsize
    o_bytes = jnp.dtype(out_dtype).itemsize

    # Sublane alignment of the M tile depends on dtype packing (bf16 packs 16).
    m_align = 16 if x2d.dtype == jnp.bfloat16 else 8
    tm = _pick_tile(M, tile_m if tile_m is not None else 1024, m_align)
    # Lane-dim alignment: 256 matches the v6e/v7x 2x256^2 MXU (128 on request).
    tn = _pick_tile(N, tile_n if tile_n is not None else 1024,
                    128 if tile_n is not None else 256)

    if tile_k is not None:
        tk = _pick_tile(K, tile_k, 128)
    else:
        # Prefer full-K residency (n_k == 1): no accumulator RMW, no K grid
        # overhead, W stays resident across the M loop.  Otherwise take the
        # largest 256-aligned chunk that keeps the working set in budget.
        tk = None
        for cand in (K, 4096, 2048, 1024, 512, 256):
            t = _pick_tile(K, cand, 256)
            nk = pl.cdiv(K, t)
            if _vmem_estimate(tm, tn, t, nk, x_bytes, w_bytes, o_bytes) <= _VMEM_BUDGET:
                tk = t
                break
        if tk is None:
            # Last resort for very large problems: shrink everything to 512.
            tm = _pick_tile(M, 512, m_align)
            tn = _pick_tile(N, 512, 256)
            tk = _pick_tile(K, 512, 256)

    n_i = pl.cdiv(M, tm)   # M tiles
    n_j = pl.cdiv(N, tn)   # N tiles
    n_k = pl.cdiv(K, tk)   # K tiles (reduction)
    k_tail = K % tk        # 0 when K divides evenly (incl. full-K residency)

    # v7x has 2 TensorCores sharded along the 'parallel' grid axes: if the
    # whole problem is a single output block, split N so both cores get work.
    if tile_n is None and n_i * n_j == 1 and N >= 256:
        tn = max(128, ((tn // 2) // 128) * 128)
        n_j = pl.cdiv(N, tn)

    est = _vmem_estimate(tm, tn, tk, n_k, x_bytes, w_bytes, o_bytes)
    vmem_limit = int(min(max(est + (8 << 20), 32 << 20), 56 << 20))

    b2d = b.reshape(1, N)
    out_shape = jax.ShapeDtypeStruct((M, N), out_dtype)

    if n_k == 1:
        # Full-K residency: 2-D grid, no scratch, single dot + fused bias.
        out = pl.pallas_call(
            _linear_kernel_fullk,
            out_shape=out_shape,
            grid_spec=pltpu.PrefetchScalarGridSpec(
                num_scalar_prefetch=0,
                # i innermost: W's block index (j, 0) is constant across the M
                # loop, so Pallas skips re-DMA of the W panel between M steps.
                grid=(n_j, n_i),
                in_specs=[
                    pl.BlockSpec((tm, tk), lambda j, i: (i, 0)),   # x
                    pl.BlockSpec((tn, tk), lambda j, i: (j, 0)),   # W (torch layout)
                    pl.BlockSpec((1, tn), lambda j, i: (0, j)),    # bias
                ],
                out_specs=pl.BlockSpec((tm, tn), lambda j, i: (i, j)),
            ),
            compiler_params=pltpu.CompilerParams(
                dimension_semantics=("parallel", "parallel"),
                vmem_limit_bytes=vmem_limit,
            ),
        )(x2d, w, b2d)
    else:
        kernel = functools.partial(
            _linear_kernel_multik, n_k=n_k, tile_k=tk, k_tail=k_tail)
        out = pl.pallas_call(
            kernel,
            out_shape=out_shape,
            grid_spec=pltpu.PrefetchScalarGridSpec(
                num_scalar_prefetch=0,
                grid=(n_j, n_i, n_k),   # K innermost (reduction)
                in_specs=[
                    pl.BlockSpec((tm, tk), lambda j, i, k: (i, k)),   # x
                    pl.BlockSpec((tn, tk), lambda j, i, k: (j, k)),   # W (torch layout)
                    pl.BlockSpec((1, tn), lambda j, i, k: (0, j)),    # bias
                ],
                out_specs=pl.BlockSpec((tm, tn), lambda j, i, k: (i, j)),
                scratch_shapes=[pltpu.VMEM((tm, tn), jnp.float32)],
            ),
            compiler_params=pltpu.CompilerParams(
                dimension_semantics=("parallel", "parallel", "arbitrary"),
                vmem_limit_bytes=vmem_limit,
            ),
        )(x2d, w, b2d)

    return out.reshape(*lead, out_feat)


def init_linear_params(key, in_feat, out_feat, dtype=jnp.float32):
    """Deterministic init mirroring torch.nn.Linear default (uniform +-1/sqrt(in))."""
    kw, kb = jax.random.split(key)
    bound = 1.0 / jnp.sqrt(jnp.float32(in_feat))
    w = jax.random.uniform(kw, (out_feat, in_feat), dtype, -bound, bound)
    b = jax.random.uniform(kb, (out_feat,), dtype, -bound, bound)
    return w, b


if __name__ == "__main__":
    key = jax.random.PRNGKey(0)
    k_x, k_p, k_x2, k_p2 = jax.random.split(key, 4)

    # --- 1) Small demo matching the module spec: x [batch, seq, in_feat] ---
    batch, seq, in_feat, out_feat = 2, 8, 32, 64
    x = jax.random.normal(k_x, (batch, seq, in_feat), dtype=jnp.float32)
    w, b = init_linear_params(k_p, in_feat, out_feat)

    y = jax.jit(linear_pallas)(x, w, b)
    jax.block_until_ready(y)
    y_ref = x @ w.T + b
    assert y.shape == (batch, seq, out_feat)
    assert jnp.allclose(y, y_ref, atol=1e-4, rtol=1e-4)

    # --- 2) Force the K-split path (ragged M, N and K edges, multik kernel) ---
    M2, K2, N2 = 111, 200, 300
    x2 = jax.random.normal(k_x2, (3, 37, K2), dtype=jnp.float32)   # M = 111
    w2, b2 = init_linear_params(k_p2, K2, N2)

    y2 = jax.jit(
        functools.partial(linear_pallas, tile_m=64, tile_n=128, tile_k=128)
    )(x2, w2, b2)
    jax.block_until_ready(y2)
    y2_ref = x2 @ w2.T + b2
    assert y2.shape == (3, 37, N2)
    assert jnp.allclose(y2, y2_ref, atol=1e-4, rtol=1e-4)

    # --- 3) Auto-tiled path on the same ragged problem (full-K residency,
    #        N split for the v7x two-core heuristic) ---
    y3 = jax.jit(linear_pallas)(x2, w2, b2)
    jax.block_until_ready(y3)
    assert jnp.allclose(y3, y2_ref, atol=1e-4, rtol=1e-4)

    # --- 4) Optional bf16 compute path (f32 accumulation, f32 output) ---
    y4 = jax.jit(functools.partial(linear_pallas, compute_in_bf16=True))(x, w, b)
    jax.block_until_ready(y4)
    assert jnp.allclose(y4, y_ref, atol=5e-2, rtol=5e-2)

    print("KERNEL_OK")
</pallas_src>

<mosaic_0001>
module attributes {stable_mosaic.version = 11 : i64} {
  func.func @_linear_kernel_fullk(%arg0: i32, %arg1: i32, %arg2: memref<16x32xf32, #tpu.memory_space<vmem>>, %arg3: memref<64x32xf32, #tpu.memory_space<vmem>>, %arg4: memref<1x64xf32, #tpu.memory_space<vmem>>, %arg5: memref<16x64xf32, #tpu.memory_space<vmem>>) attributes {dimension_semantics = [#tpu.dimension_semantics<parallel>, #tpu.dimension_semantics<parallel>], iteration_bounds = array<i64: 1, 1>, scalar_prefetch = 0 : i64, scratch_operands = 0 : i64, tpu.core_type = #tpu.core_type<tc>, window_params = [{transform_indices = @transform_0, window_bounds = array<i64: 16, 32>}, {transform_indices = @transform_1, window_bounds = array<i64: 64, 32>}, {transform_indices = @transform_2, window_bounds = array<i64: 1, 64>}, {transform_indices = @transform_3, window_bounds = array<i64: 16, 64>}]} {
    %c0 = arith.constant 0 : index
    %c0_0 = arith.constant 0 : index
    %0 = vector.load %arg2[%c0, %c0_0] : memref<16x32xf32, #tpu.memory_space<vmem>>, vector<16x32xf32>
    %c0_1 = arith.constant 0 : index
    %c0_2 = arith.constant 0 : index
    %1 = vector.load %arg3[%c0_1, %c0_2] : memref<64x32xf32, #tpu.memory_space<vmem>>, vector<64x32xf32>
    %cst = arith.constant dense<0.000000e+00> : vector<16x64xf32>
    %2 = tpu.matmul %0, %1, %cst {dimension_numbers = #tpu.dot_dimension_numbers<[1], [1], [0], [0], [0, 0, 1, 0], [], []>} : vector<16x32xf32>, vector<64x32xf32>, vector<16x64xf32> -> vector<16x64xf32>
    %c0_3 = arith.constant 0 : index
    %c0_4 = arith.constant 0 : index
    %3 = vector.load %arg4[%c0_3, %c0_4] : memref<1x64xf32, #tpu.memory_space<vmem>>, vector<1x64xf32>
    %4 = vector.broadcast %3 : vector<1x64xf32> to vector<16x64xf32>
    %5 = arith.addf %2, %4 : vector<16x64xf32>
    %c0_5 = arith.constant 0 : index
    %c0_6 = arith.constant 0 : index
    %6 = vector.load %arg5[%c0_5, %c0_6] : memref<16x64xf32, #tpu.memory_space<vmem>>, vector<16x64xf32>
    tpu.vector_store %arg5[%c0_5, %c0_6], %5 {strides = array<i32>} : memref<16x64xf32, #tpu.memory_space<vmem>>, vector<16x64xf32>,
    return
  }
  func.func @transform_0(%arg0: i32, %arg1: i32) -> (i32, i32) {
    %c0_i32 = arith.constant 0 : i32
    %c0_i32_0 = arith.constant 0 : i32
    return %arg1, %c0_i32 : i32, i32
  }
  func.func @transform_1(%arg0: i32, %arg1: i32) -> (i32, i32) {
    %c0_i32 = arith.constant 0 : i32
    %c0_i32_0 = arith.constant 0 : i32
    return %arg0, %c0_i32 : i32, i32
  }
  func.func @transform_2(%arg0: i32, %arg1: i32) -> (i32, i32) {
    %c0_i32 = arith.constant 0 : i32
    %c0_i32_0 = arith.constant 0 : i32
    return %c0_i32, %arg0 : i32, i32
  }
  func.func @transform_3(%arg0: i32, %arg1: i32) -> (i32, i32) {
    %c0_i32 = arith.constant 0 : i32
    return %arg1, %arg0 : i32, i32
  }
}

</mosaic_0001>

<llo_original>
// kernel: linear_pallas.1
$region0: #{linear_pallas.1}
  #allocation0 [shape = 'u32[]', space=smem, size = 0x4, offset = 0x4, fixed_abs, tag = 'smem constant byte address 0x4 - core index']
  #allocation1 [shape = 'u32[144,128]{1,0:T(1,128)}', space=vmem, size = 0x12000, scoped, tag = 'internal scratch']
  %s0 = inlined_call_operand.vmem [shape: f32[16,32], index: 0, kind: input, shape index: {}]
  %s1 = inlined_call_operand.vmem [shape: f32[64,32], index: 1, kind: input, shape index: {}]
  %s2 = inlined_call_operand.vmem [shape: f32[1,64], index: 2, kind: input, shape index: {}]
  %s3 = inlined_call_operand.hbm [shape: f32[16,64], index: 3, kind: output, shape index: {}]
  %s4 = sld [smem:[#allocation0]]
  $region22: #{linear_pallas.1} parent=0
    _
  %s6 = ssub.s32 1, %s4
  %s7 = scalar_select 0, %s6, %s4
  $region1: #{linear_pallas.1} parent=0
    #allocation2 [shape = 'u8[8192]{0}', space=vmem, size = 0x2000, scoped, tag = 'output window, operand 0, single buffered']
    #allocation3 [shape = 's32[1]{0}', space=sflag, size = 0x4, scoped, tag = 'scoped memory for linear_pallas.1']
    %8 = vsyncpa [#allocation3], 0
    // Predicated region
    $region2: #{linear_pallas.1} parent=1 // pred_check
      _
    $region3: #{linear_pallas.1} parent=1 // pred_check_branch
      %10 = sbr.rel (0) target = $region5
    $region4: #{linear_pallas.1} parent=1 // pred_region
      _
    $region5: #{linear_pallas.1} parent=1 // pred_fallthru
      _
    // Predicated region
    $region6: #{linear_pallas.1} parent=1 // pred_check
      _
    $region7: #{linear_pallas.1} parent=1 // pred_check_branch
      %12 = sbr.rel (0) target = $region9
    $region8: #{linear_pallas.1} parent=1 // pred_region
      _
    $region9: #{linear_pallas.1} parent=1 // pred_fallthru
      _
    // Predicated region
    $region10: #{linear_pallas.1} parent=1 // pred_check
      _
    $region11: #{linear_pallas.1} parent=1 // pred_check_branch
      %14 = sbr.rel (0) target = $region13
    $region12: #{linear_pallas.1} parent=1 // pred_region
      _
    $region13: #{linear_pallas.1} parent=1 // pred_fallthru
      _
    %v15 = vld [vmem:[%s0] sm:$0xff]
    %v16 = vld [vmem:[%s0 + $0x8] sm:$0xff]
    %v17 = vld [vmem:[%s1] sm:$0xff]
    %v18 = vld [vmem:[%s1 + $0x8] sm:$0xff]
    %v19 = vld [vmem:[%s1 + $0x10] sm:$0xff]
    %v20 = vld [vmem:[%s1 + $0x18] sm:$0xff]
    %v21 = vld [vmem:[%s1 + $0x20] sm:$0xff]
    %v22 = vld [vmem:[%s1 + $0x28] sm:$0xff]
    %v23 = vld [vmem:[%s1 + $0x30] sm:$0xff]
    %v24 = vld [vmem:[%s1 + $0x38] sm:$0xff]
    %v25 = vld [vmem:[%s2] sm:$0x1]
    %v27 = vlaneseq
    %v28 = vshrl.u32 %v27, 7
    %v29 = vsub.s32 0, %v28
    %v30 = vrot.slane %v25, %v29
    %vm32 = vcmask 261120
    %v34 = vsel %vm32, %v15, 0
    %v37 = vsel %vm32, %v16, 0
    %v40 = vsel %vm32, %v17, 0
    %v43 = vsel %vm32, %v18, 0
    %v46 = vsel %vm32, %v19, 0
    %v49 = vsel %vm32, %v20, 0
    %v52 = vsel %vm32, %v21, 0
    %v55 = vsel %vm32, %v22, 0
    %v58 = vsel %vm32, %v23, 0
    %v61 = vsel %vm32, %v24, 0
    %63 = vmatprep.subr.mxu0 0.0
    %64 = vmatpush1.xpose.msra.mxu0 %v40
    %65 = vmatprep.subr.mxu0 0.0
    %66 = vmatpush1.xpose.msra.mxu0 %v43
    %67 = vmatprep.subr.mxu0 0.0
    %68 = vmatpush1.xpose.msra.mxu0 %v46
    %69 = vmatprep.subr.mxu0 0.0
    %70 = vmatpush1.xpose.msra.mxu0 %v49
    %71 = vmatprep.subr.mxu0 0.0
    %72 = vmatpush1.xpose.msra.mxu0 %v52
    %73 = vmatprep.subr.mxu0 0.0
    %74 = vmatpush1.xpose.msra.mxu0 %v55
    %75 = vmatprep.subr.mxu0 0.0
    %76 = vmatpush1.xpose.msra.mxu0 %v58
    %77 = vmatprep.subr.mxu0 0.0
    %78 = vmatpush1.xpose.msra.mxu0 %v61
    %79 = vmatprep.subr.mxu0 0.0
    %80 = vmatpush1.xpose.msra.mxu0 0.0
    %81 = vmatprep.subr.mxu0 0.0
    %82 = vmatpush1.xpose.msra.mxu0 0.0
    %83 = vmatprep.subr.mxu0 0.0
    %84 = vmatpush1.xpose.msra.mxu0 0.0
    %85 = vmatprep.subr.mxu0 0.0
    %86 = vmatpush1.xpose.msra.mxu0 0.0
    %87 = vmatprep.subr.mxu0 0.0
    %88 = vmatpush1.xpose.msra.mxu0 0.0
    %89 = vmatprep.subr.mxu0 0.0
    %90 = vmatpush1.xpose.msra.mxu0 0.0
    %91 = vmatprep.subr.mxu0 0.0
    %92 = vmatpush1.xpose.msra.mxu0 0.0
    %93 = vmatprep.subr.mxu0 0.0
    %94 = vmatpush1.xpose.msra.mxu0 0.0
    %95 = vmatprep.subr.mxu0 0.0
    %96 = vmatpush1.xpose.msra.mxu0 0.0
    %97 = vmatprep.subr.mxu0 0.0
    %98 = vmatpush1.xpose.msra.mxu0 0.0
    %99 = vmatprep.subr.mxu0 0.0
    %100 = vmatpush1.xpose.msra.mxu0 0.0
    %101 = vmatprep.subr.mxu0 0.0
    %102 = vmatpush1.xpose.msra.mxu0 0.0
    %103 = vmatprep.subr.mxu0 0.0
    %104 = vmatpush1.xpose.msra.mxu0 0.0
    %105 = vmatprep.subr.mxu0 0.0
    %106 = vmatpush1.xpose.msra.mxu0 0.0
    %107 = vmatprep.subr.mxu0 0.0
    %108 = vmatpush1.xpose.msra.mxu0 0.0
    %109 = vmatprep.subr.mxu0 0.0
    %110 = vmatpush1.xpose.msra.mxu0 0.0
    %111 = vmatprep.subr.mxu0 0.0
    %112 = vmatpush1.xpose.msra.mxu0 0.0
    %113 = vmatprep.subr.mxu0 0.0
    %114 = vmatpush1.xpose.msra.mxu0 0.0
    %115 = vmatprep.subr.mxu0 0.0
    %116 = vmatpush1.xpose.msra.mxu0 0.0
    %117 = vmatprep.subr.mxu0 0.0
    %118 = vmatpush1.xpose.msra.mxu0 0.0
    %119 = vmatprep.subr.mxu0 0.0
    %120 = vmatpush1.xpose.msra.mxu0 0.0
    %121 = vmatprep.subr.mxu0 0.0
    %122 = vmatpush1.xpose.msra.mxu0 0.0
    %123 = vmatprep.subr.mxu0 0.0
    %124 = vmatpush1.xpose.msra.mxu0 0.0
    %125 = vmatprep.subr.mxu0 0.0
    %126 = vmatpush1.xpose.msra.mxu0 0.0
    %127 = vmatprep.mubr.f32.mxu0 0.0
    %128 = vmatmul.mubr.f32.gmra.mrb[0].mxu0 %v34
    %v129 = vpop.f32.mrb[0].mxu0
    %v130 = vadd.f32 %v30, %v129
    %v131 = vpop.f32.mrb[0].mxu0
    %132 = vmatprep.mubr.f32.mxu0 0.0
    %133 = vmatmul.mubr.f32.gmra.mrb[0].mxu0 %v37
    %v134 = vpop.f32.mrb[0].mxu0
    %v135 = vadd.f32 %v30, %v134
    %v136 = vpop.f32.mrb[0].mxu0
    %137 = vdwg.mxu0
    %vm138 = vcmask 523264
    %139 = vst.msk [vmem:[#allocation2] sm:$0xff] %vm138, %v130
    %140 = vst.msk [vmem:[#allocation2 + $0x8] sm:$0xff] %vm138, %v135
    // Predicated region
    $region14: #{linear_pallas.1} parent=1 // pred_check
      _
    $region15: #{linear_pallas.1} parent=1 // pred_check_branch
      %142 = sbr.rel (0) target = $region17
    $region16: #{linear_pallas.1} parent=1 // pred_region
      %s144 = ssub.s32 256, 256
      %145 = vsyncadd [#allocation3], %s144
      %s146 = sshll.u32 [#allocation2], 4
      %s147 = int_to_ptr.vmem [resolvable:$true] %s146
      %152 = dma.vmem_to_hbm [thread:$0]  %s147, 256, %s3, [#allocation3], 128, 128, 8
    $region17: #{linear_pallas.1} parent=1 // pred_fallthru
      _
    // Predicated region
    $region18: #{linear_pallas.1} parent=1 // pred_check
      _
    $region19: #{linear_pallas.1} parent=1 // pred_check_branch
      %154 = sbr.rel (0) target = $region21
    $region20: #{linear_pallas.1} parent=1 // pred_region
      %155 = dma.done [#allocation3], 256
    $region21: #{linear_pallas.1} parent=1 // pred_fallthru
      _
    %156 = vsyncpa [#allocation3], 1

</llo_original>
